<compile_context>
chip_gen: v7x
topology: tpu7x:2x2x1
jax: 0.10.0
libtpu: 0.0.40
codegen_flags: <defaults>
</compile_context>

<pallas_src>
import numpy as np
import jax
import jax.numpy as jnp
from jax.experimental import pallas as pl
from jax.experimental.pallas import tpu as pltpu

NUM_DIMS = 3
BOX_CH = NUM_DIMS * 2 + 1  # 6 bbox regression targets + 1 objectness score


def _cdiv(a, b):
    return -(-a // b)


def _round_up(a, b):
    return _cdiv(a, b) * b


# ----------------------------- Pallas kernel ------------------------------- #

def _matmul_bias_kernel(x_ref, w_ref, b_ref, o_ref):
    # x_ref: (tm, Cin)  w_ref: (Cin, N_pad)  b_ref: (1, N_pad)  o_ref: (tm, N_pad)
    acc = jnp.dot(x_ref[...], w_ref[...], preferred_element_type=jnp.float32)
    o_ref[...] = (acc + b_ref[...]).astype(o_ref.dtype)


def _pallas_matmul_bias(x, w, b, *, max_parallel_steps=2):
    """out = x @ w + b.  x:(M,Cin), w:(Cin,N), b:(N,).

    Returns (M, N_pad) float32 with N zero-padded up to a multiple of 128 so the
    kernel's output stores are lane-dense; the padded columns are exactly zero
    (zero weight columns + zero bias) and are sliced off by the caller.
    """
    M, Cin = x.shape
    _, N = w.shape

    N_pad = _round_up(N, 128)                      # lane-dense output stores
    if N_pad != N:
        w = jnp.pad(w, ((0, 0), (0, N_pad - N)))
        b = jnp.pad(b, ((0, N_pad - N),))

    # Sublane granularity for the M tile (bf16 packs 16 rows per vreg).
    min_tile = 16 if x.dtype == jnp.bfloat16 else 8
    # Up to `max_parallel_steps` grid steps (never create all-padding steps) so
    # v7x can shard the grid across its 2 TensorCores.
    steps = max(1, min(max_parallel_steps, M // min_tile))
    tm = _round_up(_cdiv(M, steps), min_tile)
    grid_m = _cdiv(M, tm)
    M_pad = grid_m * tm
    if M_pad != M:
        x = jnp.pad(x, ((0, M_pad - M), (0, 0)))

    out = pl.pallas_call(
        _matmul_bias_kernel,
        out_shape=jax.ShapeDtypeStruct((M_pad, N_pad), jnp.float32),
        grid_spec=pltpu.PrefetchScalarGridSpec(
            num_scalar_prefetch=0,
            grid=(grid_m,),
            in_specs=[
                pl.BlockSpec((tm, Cin), lambda i: (i, 0)),
                pl.BlockSpec((Cin, N_pad), lambda i: (0, 0)),  # constant idx -> resident
                pl.BlockSpec((1, N_pad), lambda i: (0, 0)),    # constant idx -> resident
            ],
            out_specs=pl.BlockSpec((tm, N_pad), lambda i: (i, 0)),
        ),
        compiler_params=pltpu.CompilerParams(
            dimension_semantics=("parallel",)),
    )(x, w, b.reshape(1, N_pad))
    return out[:M]


# ---------------- fused per-level ConvTranspose3d upsampling ---------------- #

def upsample_level_pallas(x, level_params, *, compute_dtype=jnp.bfloat16):
    """Apply ALL ConvTranspose3d anchor groups of one level as one fused matmul.

    x:            (B, Cin, D, H, W)   NCDHW feature map for this level.
    level_params: list of {"w": (Cin, A*7, kd, kh, kw), "b": (A*7,), "stride": (kd,kh,kw)}

    Returns:
      outs:        per-group tensors already in rpn_permuter layout
                   (B, D'*H'*W'*A, 7) with D' = D*kd, etc.
      feat_shapes: per-group upsampled spatial shapes (D', H', W').
    """
    B, Cin, D, H, W = x.shape
    # (B,Cin,D,H,W) -> (B,D,H,W,Cin) -> (M,Cin): single transpose of the input.
    xm = jnp.transpose(x, (0, 2, 3, 4, 1)).reshape(B * D * H * W, Cin)
    xm = xm.astype(compute_dtype)

    w_cols, b_cols, meta = [], [], []
    for p in level_params:
        w, bias = p["w"], p["b"]
        kd, kh, kw = p["stride"]
        cout = w.shape[1]
        A = cout // BOX_CH
        K = kd * kh * kw
        # Re-order columns to (kd, kh, kw, A*7) so the matmul output reshapes
        # straight into the permuted layout with ONE transpose (no NCDHW pass).
        wk = jnp.transpose(w, (0, 2, 3, 4, 1)).reshape(Cin, K * cout)
        w_cols.append(wk.astype(compute_dtype))
        b_cols.append(jnp.tile(bias, K))           # one bias per (i,j,l,co) column
        meta.append((A, kd, kh, kw, K * cout))

    wm = jnp.concatenate(w_cols, axis=1)           # (Cin, sum_g K_g*Cout_g)
    bm = jnp.concatenate(b_cols, axis=0)
    om = _pallas_matmul_bias(xm, wm, bm)           # (M, N_pad) float32

    outs, feat_shapes = [], []
    off = 0
    for A, kd, kh, kw, ncols in meta:
        o = om[:, off:off + ncols]
        off += ncols
        # (M, K*A*7) -> (B,D,H,W,kd,kh,kw,A,7) -> (B,D,kd,H,kh,W,kw,A,7)
        o = o.reshape(B, D, H, W, kd, kh, kw, A, BOX_CH)
        o = jnp.transpose(o, (0, 1, 4, 2, 5, 3, 6, 7, 8))
        outs.append(o.reshape(B, D * kd * H * kh * W * kw * A, BOX_CH))
        feat_shapes.append((D * kd, H * kh, W * kw))
    return outs, feat_shapes


# ------------------------ module glue (plain JAX) --------------------------- #

def init_params(key, raw_anchor_levels, channels_levels, extra_stride_levels):
    """Deterministic ConvTranspose3d weights/biases (PyTorch-like uniform init)."""
    params = []
    for ch, anchor_list, strides in zip(channels_levels, raw_anchor_levels,
                                        extra_stride_levels):
        level = []
        for raw_anchors, stride in zip(anchor_list, strides):
            A = int(raw_anchors.shape[0])
            cout = A * BOX_CH
            key, kw_key, kb_key = jax.random.split(key, 3)
            fan_in = ch * int(np.prod(stride))
            bound = 1.0 / np.sqrt(fan_in)
            w = jax.random.uniform(kw_key, (ch, cout) + tuple(int(s) for s in stride),
                                   minval=-bound, maxval=bound, dtype=jnp.float32)
            b = jax.random.uniform(kb_key, (cout,), minval=-bound, maxval=bound,
                                   dtype=jnp.float32)
            level.append({"w": w, "b": b,
                          "stride": tuple(int(s) for s in stride),
                          "num_anchors": A})
        params.append(level)
    return params


def build_anchor_description(raw_anchors_flat, combined_strides, feat_shapes,
                             scene_shape):
    # TODO(synk): exact AnchorStorage semantics (allowed_border filtering, caching,
    # device placement) were not provided; this builds the dense anchor grid only.
    anchors = []
    for raw, stride, fshape in zip(raw_anchors_flat, combined_strides, feat_shapes):
        D, H, W = fshape
        dd, hh, ww = jnp.meshgrid(jnp.arange(D), jnp.arange(H), jnp.arange(W),
                                  indexing="ij")
        centers = (jnp.stack([dd, hh, ww], axis=-1).reshape(-1, 3).astype(jnp.float32)
                   * jnp.asarray(stride, jnp.float32))
        A = raw.shape[0]
        ctr = jnp.repeat(centers[:, None, :], A, axis=1)                 # (DHW, A, 3)
        sz = jnp.broadcast_to(jnp.asarray(raw, jnp.float32),
                              (centers.shape[0], A, 3))                  # (DHW, A, 3)
        anchors.append(jnp.concatenate([ctr, sz], axis=-1).reshape(-1, 6))
    return {
        "anchors": jnp.concatenate(anchors, axis=0),
        "conv_stride_levels": jnp.asarray(np.stack(combined_strides), jnp.float32),
        "feat_shapes": feat_shapes,
        "scene_shape": tuple(int(s) for s in scene_shape),
    }


def anchor_network_upsample_forward(params_levels, raw_anchor_levels,
                                    combined_strides, rpn_feat_levels, scene_shape):
    # ZipApply + ConcatOutputListList + rpn_permuter, with one fused pallas_call
    # per level; each group output is produced directly in permuted layout
    # (B, D'*H'*W'*A, 7), so no NCDHW intermediate is ever materialized.
    permuted_groups = []
    feat_shapes = []
    for feats, level_params in zip(rpn_feat_levels, params_levels):
        outs, fshapes = upsample_level_pallas(feats, level_params)
        permuted_groups.extend(outs)
        feat_shapes.extend(fshapes)

    permuted = jnp.concatenate(permuted_groups, axis=1)

    # rpn_bbox_score_splitter: first 2*num_dims channels -> bbox, last -> score.
    rpn_bbox = permuted[..., :NUM_DIMS * 2]   # (B, N_anchors, 6)
    rpn_score = permuted[..., NUM_DIMS * 2]   # (B, N_anchors)

    raw_anchors_flat = [a for lvl in raw_anchor_levels for a in lvl]
    anchor_description = build_anchor_description(
        raw_anchors_flat, combined_strides, feat_shapes, scene_shape)
    return rpn_bbox, rpn_score, anchor_description


# --------------------------------- main ------------------------------------ #

if __name__ == "__main__":
    key = jax.random.PRNGKey(0)

    # Module configuration (two feature levels, three anchor groups total).
    B = 2
    channels_levels = [32, 32]
    conv_stride_levels = [np.array([4., 4., 4.]), np.array([8., 8., 8.])]
    extra_stride_levels = [np.array([[2, 2, 2], [1, 1, 1]]), np.array([[2, 2, 2]])]
    raw_anchor_levels = [
        [np.array([[4., 4., 4.], [6., 6., 6.]]),   # 2 anchors, upsample x2
         np.array([[8., 8., 8.]])],                # 1 anchor,  upsample x1
        [np.array([[12., 12., 12.], [16., 16., 16.]])],  # 2 anchors, upsample x2
    ]
    # combined_strides = conv_stride / extra_stride  (per anchor group, flattened)
    combined_strides = np.concatenate([
        conv_stride_levels[i] / extra_stride_levels[i]
        for i in range(len(conv_stride_levels))
    ], axis=0)

    key, k0, k1, kp = jax.random.split(key, 4)
    rpn_feat_levels = [
        jax.random.normal(k0, (B, channels_levels[0], 4, 4, 4), dtype=jnp.float32),
        jax.random.normal(k1, (B, channels_levels[1], 2, 2, 2), dtype=jnp.float32),
    ]
    scene_shape = (16, 16, 16)

    params_levels = init_params(kp, raw_anchor_levels, channels_levels,
                                extra_stride_levels)

    rpn_bbox, rpn_score, anchor_description = anchor_network_upsample_forward(
        params_levels, raw_anchor_levels, combined_strides,
        rpn_feat_levels, scene_shape)

    jax.block_until_ready(rpn_bbox)
    jax.block_until_ready(rpn_score)
    jax.block_until_ready(anchor_description["anchors"])

    assert rpn_bbox.shape == (B, 1216, 6), rpn_bbox.shape
    assert rpn_score.shape == (B, 1216), rpn_score.shape
    assert anchor_description["anchors"].shape == (1216, 6)

    print("KERNEL_OK")
</pallas_src>

<mosaic_0001>
module attributes {stable_mosaic.version = 11 : i64} {
  func.func @_matmul_bias_kernel(%arg0: i32, %arg1: memref<64x32xbf16, #tpu.memory_space<vmem>>, %arg2: memref<32x128xbf16, #tpu.memory_space<vmem>>, %arg3: memref<1x128xf32, #tpu.memory_space<vmem>>, %arg4: memref<64x128xf32, #tpu.memory_space<vmem>>) attributes {dimension_semantics = [#tpu.dimension_semantics<parallel>], iteration_bounds = array<i64: 2>, scalar_prefetch = 0 : i64, scratch_operands = 0 : i64, tpu.core_type = #tpu.core_type<tc>, window_params = [{transform_indices = @transform_0, window_bounds = array<i64: 64, 32>}, {pipeline_mode = #tpu.pipeline_mode<synchronous>, transform_indices = @transform_1, window_bounds = array<i64: 32, 128>}, {pipeline_mode = #tpu.pipeline_mode<synchronous>, transform_indices = @transform_2, window_bounds = array<i64: 1, 128>}, {transform_indices = @transform_3, window_bounds = array<i64: 64, 128>}]} {
    %c0 = arith.constant 0 : index
    %c0_0 = arith.constant 0 : index
    %0 = vector.load %arg1[%c0, %c0_0] : memref<64x32xbf16, #tpu.memory_space<vmem>>, vector<64x32xbf16>
    %c0_1 = arith.constant 0 : index
    %c0_2 = arith.constant 0 : index
    %1 = vector.load %arg2[%c0_1, %c0_2] : memref<32x128xbf16, #tpu.memory_space<vmem>>, vector<32x128xbf16>
    %cst = arith.constant dense<0.000000e+00> : vector<64x128xf32>
    %2 = tpu.matmul %0, %1, %cst {dimension_numbers = #tpu.dot_dimension_numbers<[1], [0], [0], [1], [0, 0, 1, 1], [], []>} : vector<64x32xbf16>, vector<32x128xbf16>, vector<64x128xf32> -> vector<64x128xf32>
    %c0_3 = arith.constant 0 : index
    %c0_4 = arith.constant 0 : index
    %3 = vector.load %arg3[%c0_3, %c0_4] : memref<1x128xf32, #tpu.memory_space<vmem>>, vector<1x128xf32>
    %4 = vector.broadcast %3 : vector<1x128xf32> to vector<64x128xf32>
    %5 = arith.addf %2, %4 : vector<64x128xf32>
    %c0_5 = arith.constant 0 : index
    %c0_6 = arith.constant 0 : index
    %6 = vector.load %arg4[%c0_5, %c0_6] : memref<64x128xf32, #tpu.memory_space<vmem>>, vector<64x128xf32>
    tpu.vector_store %arg4[%c0_5, %c0_6], %5 {strides = array<i32>} : memref<64x128xf32, #tpu.memory_space<vmem>>, vector<64x128xf32>,
    return
  }
  func.func @transform_0(%arg0: i32) -> (i32, i32) {
    %c0_i32 = arith.constant 0 : i32
    %c0_i32_0 = arith.constant 0 : i32
    return %arg0, %c0_i32 : i32, i32
  }
  func.func @transform_1(%arg0: i32) -> (i32, i32) {
    %c0_i32 = arith.constant 0 : i32
    %c0_i32_0 = arith.constant 0 : i32
    %c0_i32_1 = arith.constant 0 : i32
    return %c0_i32, %c0_i32_0 : i32, i32
  }
  func.func @transform_2(%arg0: i32) -> (i32, i32) {
    %c0_i32 = arith.constant 0 : i32
    %c0_i32_0 = arith.constant 0 : i32
    %c0_i32_1 = arith.constant 0 : i32
    return %c0_i32, %c0_i32_0 : i32, i32
  }
  func.func @transform_3(%arg0: i32) -> (i32, i32) {
    %c0_i32 = arith.constant 0 : i32
    %c0_i32_0 = arith.constant 0 : i32
    return %arg0, %c0_i32 : i32, i32
  }
}

</mosaic_0001>

<llo_original>
// kernel: tpu_custom_call.1
$region0: #{tpu_custom_call.1}
  #allocation0 [shape = 'u32[]', space=smem, size = 0x4, offset = 0x4, fixed_abs, tag = 'smem constant byte address 0x4 - core index']
  #allocation1 [shape = 'u32[144,128]{1,0:T(1,128)}', space=vmem, size = 0x12000, scoped, tag = 'internal scratch']
  %s0 = inlined_call_operand.vmem [shape: bf16[128,32], index: 0, kind: input, shape index: {}]
  %s1 = inlined_call_operand.vmem [shape: bf16[32,128], index: 1, kind: input, shape index: {}]
  %s2 = inlined_call_operand.vmem [shape: f32[1,128], index: 2, kind: input, shape index: {}]
  %s3 = inlined_call_operand.hbm [shape: f32[128,128], index: 3, kind: output, shape index: {}]
  %s4 = sld [smem:[#allocation0]]
  $region45: #{tpu_custom_call.1} parent=0
    _
  %s6 = ssub.s32 1, %s4
  %s7 = scalar_select 0, %s6, %s4
  $region1: #{tpu_custom_call.1} parent=0
    #allocation2 [shape = 'u8[65536]{0}', space=vmem, size = 0x10000, scoped, tag = 'output window, operand 0']
    #allocation3 [shape = 's32[2]{0}', space=sflag, size = 0x8, scoped, tag = 'scoped memory for tpu_custom_call.1']
    %8 = vsyncpa [#allocation3], 0
    %s9 = scalar_lea.sflag [#allocation3], 1
    %10 = vsyncpa %s9, 0
    loop: start=0, step=1, limit=4
    $region2: #{tpu_custom_call.1} parent=1 // loop_pre_header
      _
    $region3: #{tpu_custom_call.1} parent=1 // loop_header
      %s12 = sphi 0, %s16
      %p13 = scmp.ge.s32.totalorder %s12, 4
      %s22 = sphi 0, %s24
      %s25 = sphi 0, %s22
      %s26 = sphi 0, %s25
      %s42 = sphi 0, %s26
      %s46 = sphi 0, %s46
      %s48 = sphi 0, %s46
      %s49 = sphi 0, %s48
      %s63 = sphi 0, %s49
      %s67 = sphi 0, %s67
      %s69 = sphi 0, %s67
      %s70 = sphi 0, %s69
      %s84 = sphi 0, %s70
      %s90 = sphi 0, %s92
      %s93 = sphi 0, %s90
      %s94 = sphi 0, %s93
      %s110 = sphi 0, %s94
    $region4: #{tpu_custom_call.1} parent=1 // loop_header_branch
      %15 = sbr.rel (%p13) target = $region8
    $region5: #{tpu_custom_call.1} parent=1 // loop_body
      %s17 = ssub.s32 %s12, 1
      %s18 = ssub.s32 %s12, 2
      %s19 = sadd.s32 %s12, 1
      %s20 = ssub.s32 %s12, %s19
      %p21 = scmp.eq.s32.totalorder %s20, 0
      %s23 = sadd.s32 %s22, 1
      %s24 = scalar_select %p21, %s22, %s23
      %p27 = pneg %p21
      %p28 = scmp.eq.s32.totalorder %s12, 1
      %p29 = por %p27, %p28
      %p30 = scmp.ne.s32.totalorder %s22, %s25
      %p31 = scmp.eq.s32.totalorder %s12, 0
      %p32 = por %p30, %p31
      %p33 = scmp.ne.s32.totalorder %s22, %s25
      %p34 = scmp.eq.s32.totalorder %s17, 1
      %p35 = por %p33, %p34
      %p36 = scmp.ne.s32.totalorder %s25, %s26
      %p37 = scmp.eq.s32.totalorder %s17, 0
      %p38 = por %p36, %p37
      %p39 = scmp.ne.s32.totalorder %s25, %s26
      %p40 = scmp.eq.s32.totalorder %s18, 1
      %p41 = por %p39, %p40
      %p43 = scmp.ne.s32.totalorder %s26, %s42
      %p44 = scmp.eq.s32.totalorder %s18, 0
      %p45 = por %p43, %p44
      %s47 = sadd.s32 %s46, 1
      %p50 = scmp.eq.s32.totalorder %s12, 1
      %p51 = scmp.ne.s32.totalorder %s46, %s48
      %p52 = scmp.eq.s32.totalorder %s12, 0
      %p53 = por %p51, %p52
      %p54 = scmp.ne.s32.totalorder %s46, %s48
      %p55 = scmp.eq.s32.totalorder %s17, 1
      %p56 = por %p54, %p55
      %p57 = scmp.ne.s32.totalorder %s48, %s49
      %p58 = scmp.eq.s32.totalorder %s17, 0
      %p59 = por %p57, %p58
      %p60 = scmp.ne.s32.totalorder %s48, %s49
      %p61 = scmp.eq.s32.totalorder %s18, 1
      %p62 = por %p60, %p61
      %p64 = scmp.ne.s32.totalorder %s49, %s63
      %p65 = scmp.eq.s32.totalorder %s18, 0
      %p66 = por %p64, %p65
      %s68 = sadd.s32 %s67, 1
      %p71 = scmp.eq.s32.totalorder %s12, 1
      %p72 = scmp.ne.s32.totalorder %s67, %s69
      %p73 = scmp.eq.s32.totalorder %s12, 0
      %p74 = por %p72, %p73
      %p75 = scmp.ne.s32.totalorder %s67, %s69
      %p76 = scmp.eq.s32.totalorder %s17, 1
      %p77 = por %p75, %p76
      %p78 = scmp.ne.s32.totalorder %s69, %s70
      %p79 = scmp.eq.s32.totalorder %s17, 0
      %p80 = por %p78, %p79
      %p81 = scmp.ne.s32.totalorder %s69, %s70
      %p82 = scmp.eq.s32.totalorder %s18, 1
      %p83 = por %p81, %p82
      %p85 = scmp.ne.s32.totalorder %s70, %s84
      %p86 = scmp.eq.s32.totalorder %s18, 0
      %p87 = por %p85, %p86
      %s88 = ssub.s32 %s12, %s19
      %p89 = scmp.eq.s32.totalorder %s88, 0
      %s91 = sadd.s32 %s90, 1
      %s92 = scalar_select %p89, %s90, %s91
      %p95 = pneg %p89
      %p96 = scmp.eq.s32.totalorder %s12, 1
      %p97 = por %p95, %p96
      %p98 = scmp.ne.s32.totalorder %s90, %s93
      %p99 = scmp.eq.s32.totalorder %s12, 0
      %p100 = por %p98, %p99
      %p101 = scmp.ne.s32.totalorder %s90, %s93
      %p102 = scmp.eq.s32.totalorder %s17, 1
      %p103 = por %p101, %p102
      %p104 = scmp.ne.s32.totalorder %s93, %s94
      %p105 = scmp.eq.s32.totalorder %s17, 0
      %p106 = por %p104, %p105
      %p107 = scmp.ne.s32.totalorder %s93, %s94
      %p108 = scmp.eq.s32.totalorder %s18, 1
      %p109 = por %p107, %p108
      %p111 = scmp.ne.s32.totalorder %s94, %s110
      %p112 = scmp.eq.s32.totalorder %s18, 0
      %p113 = por %p111, %p112
      %p114 = scmp.le.s32.totalorder 1, %s12
      %p115 = scmp.lt.s32.totalorder %s12, 3
      %p116 = pnand %p114, %p115
      %p117 = pneg %p116
      // Predicated region
      $region9: #{tpu_custom_call.1} parent=5 // pred_check
        _
      $region10: #{tpu_custom_call.1} parent=5 // pred_check_branch
        %119 = sbr.rel (%p116) target = $region12
      $region11: #{tpu_custom_call.1} parent=5 // pred_region
        %s120 = ssub.s32 %s12, 1
        // Predicated region
        $region13: #{tpu_custom_call.1} parent=11 // pred_check
          %p121 = pneg %p59
        $region14: #{tpu_custom_call.1} parent=11 // pred_check_branch
          %123 = sbr.rel (%p121) target = $region16
        $region15: #{tpu_custom_call.1} parent=11 // pred_region
          _
        $region16: #{tpu_custom_call.1} parent=11 // pred_fallthru
          _
        // Predicated region
        $region17: #{tpu_custom_call.1} parent=11 // pred_check
          %p124 = pneg %p80
        $region18: #{tpu_custom_call.1} parent=11 // pred_check_branch
          %126 = sbr.rel (%p124) target = $region20
        $region19: #{tpu_custom_call.1} parent=11 // pred_region
          _
        $region20: #{tpu_custom_call.1} parent=11 // pred_fallthru
          _
      $region12: #{tpu_custom_call.1} parent=5 // pred_fallthru
        _
      %p127 = scmp.lt.s32.totalorder %s12, 2
      // Predicated region
      $region21: #{tpu_custom_call.1} parent=5 // pred_check
        %p128 = pneg %p127
      $region22: #{tpu_custom_call.1} parent=5 // pred_check_branch
        %130 = sbr.rel (%p128) target = $region24
      $region23: #{tpu_custom_call.1} parent=5 // pred_region
        // Predicated region
        $region25: #{tpu_custom_call.1} parent=23 // pred_check
          %p131 = pneg %p32
        $region26: #{tpu_custom_call.1} parent=23 // pred_check_branch
          %133 = sbr.rel (%p131) target = $region28
        $region27: #{tpu_custom_call.1} parent=23 // pred_region
          %s134 = smul.u32 8, %s12
          %p135 = scmp.lt.s32.totalorder %s134, 15
          %s136 = scalar_select %p135, %s134, 15
          %s137 = smul.addr %s136, 4
          %s138 = scalar_lea.vmem %s0, %s137
          %s139 = smul.u32 8, %s12
        $region28: #{tpu_custom_call.1} parent=23 // pred_fallthru
          _
      $region24: #{tpu_custom_call.1} parent=5 // pred_fallthru
        _
      %p140 = scmp.le.s32.totalorder 1, %s12
      %p141 = scmp.lt.s32.totalorder %s12, 3
      %p142 = pnand %p140, %p141
      %p143 = pneg %p142
      // Predicated region
      $region29: #{tpu_custom_call.1} parent=5 // pred_check
        _
      $region30: #{tpu_custom_call.1} parent=5 // pred_check_branch
        %145 = sbr.rel (%p142) target = $region32
      $region31: #{tpu_custom_call.1} parent=5 // pred_region
        %s146 = ssub.s32 %s12, 1
        %s147 = smul.u32 8, %s17
        %p148 = scmp.lt.s32.totalorder %s147, 15
        %s149 = scalar_select %p148, %s147, 15
        %s150 = smul.addr %s149, 4
        %s151 = scalar_lea.vmem %s0, %s150
        %p152 = pneg %p38
        %p153 = pneg %p35
        %p154 = pneg %p59
        %p155 = pneg %p56
        %p156 = pneg %p80
        %p157 = pneg %p77
        %p158 = pneg %p106
        %p159 = pneg %p103
        %s160 = sand.u32 %s93, 1
        %s161 = scalar_lea.sflag [#allocation3], %s160
        %s162 = sand.u32 %s93, 1
        %s163 = smul.addr %s162, 64
        %s164 = scalar_lea.vmem [#allocation2], %s163
        %s165 = smul.u32 8, %s17
        %p166 = scmp.lt.s32.totalorder %s165, 15
        %s167 = scalar_select %p166, %s165, 15
        %s168 = smul.addr %s167, 4
        %s169 = scalar_lea.vmem %s0, %s168
        %s170 = smul.u32 8, %s17
        %s171 = smul.u32 8, %s17
        %v173 = vld [vmem:[%s169] sm:$0xf]
        %v174 = vld [vmem:[%s169 + $0x4] sm:$0xf]
        %v175 = vld [vmem:[%s169 + $0x8] sm:$0xf]
        %v176 = vld [vmem:[%s169 + $0xc] sm:$0xf]
        %v177 = vld [vmem:[%s169 + $0x10] sm:$0xf]
        %v178 = vld [vmem:[%s169 + $0x14] sm:$0xf]
        %v179 = vld [vmem:[%s169 + $0x18] sm:$0xf]
        %v180 = vld [vmem:[%s169 + $0x1c] sm:$0xf]
        %v181 = vld [vmem:[%s1] sm:$0xf]
        %v182 = vld [vmem:[%s1 + $0x4] sm:$0xf]
        %v183 = vld [vmem:[%s1 + $0x8] sm:$0xf]
        %v184 = vld [vmem:[%s1 + $0xc] sm:$0xf]
        %v185 = vld [vmem:[%s2] sm:$0x1]
        %v187 = vlaneseq
        %v188 = vshrl.u32 %v187, 7
        %v189 = vsub.s32 0, %v188
        %v190 = vrot.slane %v185, %v189
        %v200 = vunpack.c.l.b16 %v173
        %v201 = vunpack.c.l.b16 %v174
        %v202 = vunpack.c.l.b16 %v175
        %v203 = vunpack.c.l.b16 %v176
        %v204 = vunpack.c.l.b16 %v177
        %v205 = vunpack.c.l.b16 %v178
        %v206 = vunpack.c.l.b16 %v179
        %v207 = vunpack.c.l.b16 %v180
        %v208 = vpack.c.b16 %v201, %v200
        %v209 = vpack.c.b16 %v203, %v202
        %v210 = vpack.c.b16 %v205, %v204
        %v211 = vpack.c.b16 %v207, %v206
        %v216 = vunpack.c.l.b16 %v181
        %v217 = vunpack.c.l.b16 %v182
        %v218 = vunpack.c.l.b16 %v183
        %v219 = vunpack.c.l.b16 %v184
        %v220 = vpack.c.b16 %v217, %v216
        %v221 = vpack.c.b16 %v219, %v218
        %vm224 = vcmask 261120
        %v226 = vsel %vm224, %v208, 0
        %v229 = vsel %vm224, %v209, 0
        %v232 = vsel %vm224, %v210, 0
        %v235 = vsel %vm224, %v211, 0
        %237 = vmatprep.subr.bf16.mxu0 0
        %238 = vmatpush1.bf16.msra.mxu0 %v220
        %239 = vmatprep.subr.bf16.mxu0 0
        %240 = vmatpush1.bf16.msra.mxu0 %v221
        %241 = vmatprep.subr.bf16.mxu0 0
        %242 = vmatpush1.bf16.msra.mxu0 0
        %243 = vmatprep.subr.bf16.mxu0 0
        %244 = vmatpush1.bf16.msra.mxu0 0
        %245 = vmatprep.subr.bf16.mxu0 0
        %246 = vmatpush1.bf16.msra.mxu0 0
        %247 = vmatprep.subr.bf16.mxu0 0
        %248 = vmatpush1.bf16.msra.mxu0 0
        %249 = vmatprep.subr.bf16.mxu0 0
        %250 = vmatpush1.bf16.msra.mxu0 0
        %251 = vmatprep.subr.bf16.mxu0 0
        %252 = vmatpush1.bf16.msra.mxu0 0
        %253 = vmatprep.subr.bf16.mxu0 0
        %254 = vmatpush1.bf16.msra.mxu0 0
        %255 = vmatprep.subr.bf16.mxu0 0
        %256 = vmatpush1.bf16.msra.mxu0 0
        %257 = vmatprep.subr.bf16.mxu0 0
        %258 = vmatpush1.bf16.msra.mxu0 0
        %259 = vmatprep.subr.bf16.mxu0 0
        %260 = vmatpush1.bf16.msra.mxu0 0
        %261 = vmatprep.subr.bf16.mxu0 0
        %262 = vmatpush1.bf16.msra.mxu0 0
        %263 = vmatprep.subr.bf16.mxu0 0
        %264 = vmatpush1.bf16.msra.mxu0 0
        %265 = vmatprep.subr.bf16.mxu0 0
        %266 = vmatpush1.bf16.msra.mxu0 0
        %267 = vmatprep.subr.bf16.mxu0 0
        %268 = vmatpush1.bf16.msra.mxu0 0
        %269 = vmatprep.mubr.bf16.mxu0 0
        %270 = vmatmul.mubr.bf16.gmra.mrb[0].mxu0 %v226
        %v271 = vpop.f32.mrb[0].mxu0
        %v272 = vadd.f32 %v190, %v271
        %v273 = vpop.f32.mrb[0].mxu0
        %v274 = vpop.f32.mrb[0].mxu0
        %v275 = vadd.f32 %v190, %v274
        %v276 = vpop.f32.mrb[0].mxu0
        %277 = vmatprep.mubr.bf16.mxu0 0
        %278 = vmatmul.mubr.bf16.gmra.mrb[0].mxu0 %v229
        %v279 = vpop.f32.mrb[0].mxu0
        %v280 = vadd.f32 %v190, %v279
        %v281 = vpop.f32.mrb[0].mxu0
        %v282 = vpop.f32.mrb[0].mxu0
        %v283 = vadd.f32 %v190, %v282
        %v284 = vpop.f32.mrb[0].mxu0
        %285 = vmatprep.mubr.bf16.mxu0 0
        %286 = vmatmul.mubr.bf16.gmra.mrb[0].mxu0 %v232
        %v287 = vpop.f32.mrb[0].mxu0
        %v288 = vadd.f32 %v190, %v287
        %v289 = vpop.f32.mrb[0].mxu0
        %v290 = vpop.f32.mrb[0].mxu0
        %v291 = vadd.f32 %v190, %v290
        %v292 = vpop.f32.mrb[0].mxu0
        %293 = vmatprep.mubr.bf16.mxu0 0
        %294 = vmatmul.mubr.bf16.gmra.mrb[0].mxu0 %v235
        %v295 = vpop.f32.mrb[0].mxu0
        %v296 = vadd.f32 %v190, %v295
        %v297 = vpop.f32.mrb[0].mxu0
        %v298 = vpop.f32.mrb[0].mxu0
        %v299 = vadd.f32 %v190, %v298
        %v300 = vpop.f32.mrb[0].mxu0
        %301 = vdwg.mxu0
        %302 = vst [vmem:[%s164] sm:$0xff] %v272
        %303 = vst [vmem:[%s164 + $0x8] sm:$0xff] %v275
        %304 = vst [vmem:[%s164 + $0x10] sm:$0xff] %v280
        %305 = vst [vmem:[%s164 + $0x18] sm:$0xff] %v283
        %306 = vst [vmem:[%s164 + $0x20] sm:$0xff] %v288
        %307 = vst [vmem:[%s164 + $0x28] sm:$0xff] %v291
        %308 = vst [vmem:[%s164 + $0x30] sm:$0xff] %v296
        %309 = vst [vmem:[%s164 + $0x38] sm:$0xff] %v299
        %s310 = sand.u32 %s93, 1
        %s311 = scalar_lea.sflag [#allocation3], %s310
        %s312 = sand.u32 %s93, 1
        %s313 = smul.addr %s312, 64
        %s314 = scalar_lea.vmem [#allocation2], %s313
        // Predicated region
        $region33: #{tpu_custom_call.1} parent=31 // pred_check
          %p315 = pneg %p103
        $region34: #{tpu_custom_call.1} parent=31 // pred_check_branch
          %317 = sbr.rel (%p315) target = $region36
        $region35: #{tpu_custom_call.1} parent=31 // pred_region
          %s318 = smul.u32 8, %s17
          %s320 = ssub.s32 1024, 1024
          %321 = vsyncadd %s311, %s320
          %s322 = smul.addr %s318, 128
          %s323 = scalar_lea.hbm %s3, %s322
          %s324 = sshll.u32 %s314, 4
          %s325 = int_to_ptr.vmem [resolvable:$true] %s324
          %330 = dma.vmem_to_hbm [thread:$0]  %s325, 1024, %s323, %s311, 128, 128, 8
        $region36: #{tpu_custom_call.1} parent=31 // pred_fallthru
          _
      $region32: #{tpu_custom_call.1} parent=5 // pred_fallthru
        _
      %p331 = scmp.le.s32.totalorder 2, %s12
      // Predicated region
      $region37: #{tpu_custom_call.1} parent=5 // pred_check
        %p332 = pneg %p331
      $region38: #{tpu_custom_call.1} parent=5 // pred_check_branch
        %334 = sbr.rel (%p332) target = $region40
      $region39: #{tpu_custom_call.1} parent=5 // pred_region
        %s335 = ssub.s32 %s12, 2
        // Predicated region
        $region41: #{tpu_custom_call.1} parent=39 // pred_check
          %p336 = pneg %p109
        $region42: #{tpu_custom_call.1} parent=39 // pred_check_branch
          %338 = sbr.rel (%p336) target = $region44
        $region43: #{tpu_custom_call.1} parent=39 // pred_region
          %s339 = sand.u32 %s94, 1
          %s340 = scalar_lea.sflag [#allocation3], %s339
          %s341 = sand.u32 %s94, 1
          %s342 = smul.addr %s341, 64
          %s343 = scalar_lea.vmem [#allocation2], %s342
          %344 = dma.done %s340, 1024
        $region44: #{tpu_custom_call.1} parent=39 // pred_fallthru
          _
      $region40: #{tpu_custom_call.1} parent=5 // pred_fallthru
        _
    $region6: #{tpu_custom_call.1} parent=1 // loop_footer
      %s16 = sadd.s32 1, %s12
    $region7: #{tpu_custom_call.1} parent=1 // loop_footer_branch
      %11 = sbr.rel target = $region3
    $region8: #{tpu_custom_call.1} parent=1 // loop_exit
      _
    %345 = vsyncpa [#allocation3], 1
    %s346 = scalar_lea.sflag [#allocation3], 1
    %347 = vsyncpa %s346, 1

</llo_original>
